<compile_context>
chip_gen: v7x
topology: tpu7x:2x2x1
jax: 0.10.0
libtpu: 0.0.40
codegen_flags: <defaults>
</compile_context>

<pallas_src>
import functools

import jax
import jax.numpy as jnp
from jax import lax
from jax.experimental import pallas as pl
from jax.experimental.pallas import tpu as pltpu

NEG_SLOPE = 0.1     # LeakyReLU slope inside UNetConvBlock
EPS = 1e-5          # nn.InstanceNorm2d default eps


def _lrelu(x, slope):
    return jnp.where(x >= 0, x, slope * x)


# ----------------------------- fused Pallas kernel ---------------------------

def unet_conv_block_kernel(xs_ref, w1i_ref, w2_ref, b2_ref, gamma_ref, beta_ref,
                           mask_ref, out_ref, h2s_ref, *, half, Mo, inv_hw, offs):
    """Whole UNetConvBlock for one batch element, channels-first flat layout.

    xs_ref   : (9*Cin+1, N1p) bf16 -- K-stacked conv_1/identity RHS; row block t holds
                                      x shifted by offs[t]; last row is ones (bias).
    w1i_ref  : (2*Co, 9*Cin+1) bf16 -- rows [0:Co]  = conv_1 weights (+ b1 column)
                                       rows [Co:2Co]= identity 1x1   (+ bid column)
    w2_ref   : (Co, 9*Co)     bf16 -- conv_2 weights, tap-stacked along K.
    b2_ref   : (Co, 1)   f32;  gamma/beta: (Co//2, 1) f32.
    mask_ref : (1, N1p)  f32  -- 1.0 at interior (non-padding, non-tail) pixels.
    out_ref  : (Co, N1p) f32  -- output at padded-flat coordinates (cropped by wrapper).
    h2s_ref  : (9*Co, N1p+2*Mo) bf16 persistent scratch -- conv_2's K-stacked RHS.
    """
    Co, N1p = out_ref.shape

    # ---- conv_1 + identity (+ b1/bid) as a single MXU GEMM, f32 accumulation ----
    y = jnp.dot(w1i_ref[...], xs_ref[...], preferred_element_type=jnp.float32)
    y1 = y[:Co, :]        # conv_1(x) + b1
    ident = y[Co:, :]     # identity(x) + bid

    # ---- HIN: InstanceNorm2d (affine) on the first `half` channels, interior only ----
    mask = mask_ref[...]                                     # (1, N1p) f32
    y1h = y1[:half, :]
    mu = jnp.sum(y1h * mask, axis=-1, keepdims=True) * inv_hw
    d = y1h - mu
    var = jnp.sum(d * d * mask, axis=-1, keepdims=True) * inv_hw
    y1h = d * lax.rsqrt(var + EPS) * gamma_ref[...] + beta_ref[...]
    h1 = jnp.concatenate([y1h, y1[half:, :]], axis=0)
    # LReLU, re-zero the SAME-padding ring / lane tail, cast to bf16 exactly once.
    h1 = (_lrelu(h1, NEG_SLOPE) * mask).astype(jnp.bfloat16)

    # ---- build conv_2's K-stacked RHS in scratch: tap t reads h1 shifted by offs[t],
    #      so store h1 into row block t at lane offset Mo - offs[t].  Columns a step
    #      never writes only feed ring/tail outputs (cropped) -> no zero-fill needed. ----
    for t, o in enumerate(offs):
        h2s_ref[t * Co:(t + 1) * Co, Mo - o:Mo - o + N1p] = h1

    # ---- conv_2 as ONE GEMM (K = 9*Co) over the lane-aligned interior slice ----
    y2 = jnp.dot(w2_ref[...], h2s_ref[:, Mo:Mo + N1p],
                 preferred_element_type=jnp.float32)
    y2 = _lrelu(y2 + b2_ref[...], NEG_SLOPE)

    out_ref[...] = (y2 + ident).astype(out_ref.dtype)


# ----------------------------- wrapper ----------------------------------------

def unet_conv_block(x_nchw, p):
    """Fused UNetConvBlock forward.  x_nchw: (B, Cin, H, W) f32 -> (B, Co, H, W) f32."""
    B, Cin, H, W = x_nchw.shape
    Co = p['w1'].shape[-1]
    half = Co // 2
    Hp, Wp = H + 2, W + 2
    N1 = Hp * Wp                                  # flat padded spatial size (324)
    N1p = ((N1 + 127) // 128) * 128               # lane-padded to 128 multiple (384)
    m = Wp + 1                                    # max |3x3 tap offset| in flat coords
    Mo = 128                                      # scratch interior lane offset (aligned)
    K1 = 9 * Cin + 1
    K2 = 9 * Co
    offs = tuple((dy - 1) * Wp + (dx - 1) for dy in range(3) for dx in range(3))

    # --- K-stacked conv_1 / identity RHS (bf16): row block t = x shifted by offs[t];
    #     trailing ones row folds b1 / bid into the weight matrix. ---
    xflat = jnp.pad(x_nchw, ((0, 0), (0, 0), (1, 1), (1, 1))).reshape(B, Cin, N1)
    xflat = jnp.pad(xflat, ((0, 0), (0, 0), (m, m + (N1p - N1))))
    taps = [xflat[:, :, m + o: m + o + N1p] for o in offs]
    ones = jnp.ones((B, 1, N1p), x_nchw.dtype)
    xs = jnp.concatenate(taps + [ones], axis=1).astype(jnp.bfloat16)     # (B, K1, N1p)

    # --- stacked LHS weights (bf16): conv_1 (+b1) rows then identity (+bid) rows ---
    w1k = jnp.transpose(p['w1'], (3, 0, 1, 2)).reshape(Co, 9 * Cin)      # [co, t*Cin+ci]
    w1_full = jnp.concatenate([w1k, p['b1'].reshape(Co, 1)], axis=1)     # (Co, K1)
    wid_full = jnp.zeros((Co, K1), x_nchw.dtype)
    wid_full = wid_full.at[:, 4 * Cin:5 * Cin].set(p['wid'][0, 0].T)     # center tap
    wid_full = wid_full.at[:, K1 - 1].set(p['bid'].reshape(Co))
    w1i = jnp.concatenate([w1_full, wid_full], axis=0).astype(jnp.bfloat16)  # (2Co, K1)

    w2k = jnp.transpose(p['w2'], (3, 0, 1, 2)).reshape(Co, K2).astype(jnp.bfloat16)

    # Interior-pixel mask over padded-flat coordinates (zero on ring and lane tail).
    q = jnp.arange(N1p)
    r, s = q // Wp, q % Wp
    mask = ((q < N1) & (r >= 1) & (r <= H) & (s >= 1) & (s <= W))
    mask = mask.astype(jnp.float32)[None, :]

    kernel = functools.partial(unet_conv_block_kernel, half=half, Mo=Mo,
                               inv_hw=1.0 / (H * W), offs=offs)
    out_flat = pl.pallas_call(
        kernel,
        out_shape=jax.ShapeDtypeStruct((B, Co, N1p), jnp.float32),
        grid=(B,),
        in_specs=[
            pl.BlockSpec((None, K1, N1p), lambda b: (b, 0, 0)),    # stacked x (per batch)
            pl.BlockSpec((2 * Co, K1), lambda b: (0, 0)),          # conv_1 + identity W
            pl.BlockSpec((Co, K2), lambda b: (0, 0)),              # conv_2 W
            pl.BlockSpec((Co, 1), lambda b: (0, 0)),               # b2
            pl.BlockSpec((half, 1), lambda b: (0, 0)),             # gamma
            pl.BlockSpec((half, 1), lambda b: (0, 0)),             # beta
            pl.BlockSpec((1, N1p), lambda b: (0, 0)),              # interior mask
        ],
        out_specs=pl.BlockSpec((None, Co, N1p), lambda b: (b, 0, 0)),
        scratch_shapes=[pltpu.VMEM((K2, N1p + 2 * Mo), jnp.bfloat16)],
        compiler_params=pltpu.CompilerParams(
            dimension_semantics=("parallel",)),                    # batch across TCs (v7x)
    )(xs, w1i, w2k, p['b2'], p['gamma'], p['beta'], mask)

    # Drop the lane tail and the padded ring: (B, Co, N1p) -> (B, Co, H, W) NCHW.
    return out_flat[:, :, :N1].reshape(B, Co, Hp, Wp)[:, :, 1:H + 1, 1:W + 1]


# ----------------------------- pure-JAX reference ----------------------------

def unet_conv_block_ref(x, p):
    def conv(v, w, b):
        y = lax.conv_general_dilated(v, w, (1, 1), 'SAME',
                                     dimension_numbers=('NCHW', 'HWIO', 'NCHW'))
        return y + b.reshape(1, -1, 1, 1)

    out = conv(x, p['w1'], p['b1'])
    half = out.shape[1] // 2
    o1, o2 = out[:, :half], out[:, half:]
    mu = o1.mean(axis=(2, 3), keepdims=True)
    var = ((o1 - mu) ** 2).mean(axis=(2, 3), keepdims=True)
    o1 = ((o1 - mu) / jnp.sqrt(var + EPS) * p['gamma'].reshape(1, -1, 1, 1)
          + p['beta'].reshape(1, -1, 1, 1))
    out = jnp.concatenate([o1, o2], axis=1)
    out = jnp.where(out >= 0, out, NEG_SLOPE * out)
    out = conv(out, p['w2'], p['b2'])
    out = jnp.where(out >= 0, out, NEG_SLOPE * out)
    return out + conv(x, p['wid'], p['bid'])


# ----------------------------- main -------------------------------------------

if __name__ == "__main__":
    B, Cin, H, W = 2, 4, 16, 16          # PyTorch NCHW input (2, 4, 16, 16)
    Co = 16                              # UNetConvBlock(in_size=4, out_size=16)

    keys = jax.random.split(jax.random.PRNGKey(0), 8)
    x = jax.random.normal(keys[0], (B, Cin, H, W), jnp.float32)

    scale = 0.1
    params = dict(
        w1=jax.random.normal(keys[1], (3, 3, Cin, Co), jnp.float32) * scale,   # conv_1 (HWIO)
        b1=jax.random.normal(keys[2], (Co, 1), jnp.float32) * scale,
        w2=jax.random.normal(keys[3], (3, 3, Co, Co), jnp.float32) * scale,    # conv_2
        b2=jax.random.normal(keys[4], (Co, 1), jnp.float32) * scale,
        wid=jax.random.normal(keys[5], (1, 1, Cin, Co), jnp.float32) * scale,  # identity 1x1
        bid=jax.random.normal(keys[6], (Co, 1), jnp.float32) * scale,
        gamma=jnp.ones((Co // 2, 1), jnp.float32),     # InstanceNorm2d affine (default init)
        beta=jnp.zeros((Co // 2, 1), jnp.float32),
    )

    out = jax.jit(unet_conv_block)(x, params)
    out = jax.block_until_ready(out)

    ref = unet_conv_block_ref(x, params)
    assert out.shape == (B, Co, H, W), out.shape
    if not jnp.allclose(out, ref, rtol=5e-2, atol=2e-2):
        max_err = float(jnp.max(jnp.abs(out - ref)))
        raise AssertionError(f"Pallas output mismatch vs reference, max abs err {max_err}")

    print("KERNEL_OK")
</pallas_src>

<mosaic_0001>
module attributes {stable_mosaic.version = 11 : i64} {
  func.func @unet_conv_block_kernel(%arg0: i32, %arg1: memref<1x37x384xbf16, #tpu.memory_space<vmem>>, %arg2: memref<32x37xbf16, #tpu.memory_space<vmem>>, %arg3: memref<16x144xbf16, #tpu.memory_space<vmem>>, %arg4: memref<16x1xf32, #tpu.memory_space<vmem>>, %arg5: memref<8x1xf32, #tpu.memory_space<vmem>>, %arg6: memref<8x1xf32, #tpu.memory_space<vmem>>, %arg7: memref<1x384xf32, #tpu.memory_space<vmem>>, %arg8: memref<1x16x384xf32, #tpu.memory_space<vmem>>, %arg9: memref<144x640xbf16, #tpu.memory_space<vmem>>) attributes {dimension_semantics = [#tpu.dimension_semantics<parallel>], iteration_bounds = array<i64: 2>, scalar_prefetch = 0 : i64, scratch_operands = 1 : i64, tpu.core_type = #tpu.core_type<tc>, window_params = [{transform_indices = @transform_0, window_bounds = array<i64: 1, 37, 384>}, {pipeline_mode = #tpu.pipeline_mode<synchronous>, transform_indices = @transform_1, window_bounds = array<i64: 32, 37>}, {pipeline_mode = #tpu.pipeline_mode<synchronous>, transform_indices = @transform_2, window_bounds = array<i64: 16, 144>}, {pipeline_mode = #tpu.pipeline_mode<synchronous>, transform_indices = @transform_3, window_bounds = array<i64: 16, 1>}, {pipeline_mode = #tpu.pipeline_mode<synchronous>, transform_indices = @transform_4, window_bounds = array<i64: 8, 1>}, {pipeline_mode = #tpu.pipeline_mode<synchronous>, transform_indices = @transform_5, window_bounds = array<i64: 8, 1>}, {pipeline_mode = #tpu.pipeline_mode<synchronous>, transform_indices = @transform_6, window_bounds = array<i64: 1, 384>}, {transform_indices = @transform_7, window_bounds = array<i64: 1, 16, 384>}]} {
    %c0 = arith.constant 0 : index
    %c0_0 = arith.constant 0 : index
    %0 = vector.load %arg2[%c0, %c0_0] : memref<32x37xbf16, #tpu.memory_space<vmem>>, vector<32x37xbf16>
    %c0_1 = arith.constant 0 : index
    %c0_2 = arith.constant 0 : index
    %c0_3 = arith.constant 0 : index
    %1 = vector.load %arg1[%c0_1, %c0_2, %c0_3] : memref<1x37x384xbf16, #tpu.memory_space<vmem>>, vector<1x37x384xbf16>
    %2 = vector.shape_cast %1 : vector<1x37x384xbf16> to vector<37x384xbf16>
    %cst = arith.constant dense<0.000000e+00> : vector<32x384xf32>
    %3 = tpu.matmul %0, %2, %cst {dimension_numbers = #tpu.dot_dimension_numbers<[1], [0], [0], [1], [0, 0, 1, 1], [], []>} : vector<32x37xbf16>, vector<37x384xbf16>, vector<32x384xf32> -> vector<32x384xf32>
    %4 = vector.extract_strided_slice %3 {offsets = [0, 0], sizes = [16, 384], strides = [1, 1]} : vector<32x384xf32> to vector<16x384xf32>
    %5 = vector.extract_strided_slice %3 {offsets = [16, 0], sizes = [16, 384], strides = [1, 1]} : vector<32x384xf32> to vector<16x384xf32>
    %c0_4 = arith.constant 0 : index
    %c0_5 = arith.constant 0 : index
    %6 = vector.load %arg7[%c0_4, %c0_5] : memref<1x384xf32, #tpu.memory_space<vmem>>, vector<1x384xf32>
    %7 = vector.extract_strided_slice %4 {offsets = [0, 0], sizes = [8, 384], strides = [1, 1]} : vector<16x384xf32> to vector<8x384xf32>
    %8 = vector.broadcast %6 : vector<1x384xf32> to vector<8x384xf32>
    %9 = arith.mulf %7, %8 : vector<8x384xf32>
    %cst_6 = arith.constant dense<0.000000e+00> : vector<8xf32>
    %10 = vector.multi_reduction <add>, %9, %cst_6 [1] : vector<8x384xf32> to vector<8xf32>
    %11 = vector.shape_cast %10 : vector<8xf32> to vector<8x1xf32>
    %cst_7 = arith.constant 3.906250e-03 : f32
    %12 = vector.broadcast %cst_7 : f32 to vector<8x1xf32>
    %13 = arith.mulf %11, %12 : vector<8x1xf32>
    %14 = vector.broadcast %13 : vector<8x1xf32> to vector<8x384xf32>
    %15 = arith.subf %7, %14 : vector<8x384xf32>
    %16 = arith.mulf %15, %15 : vector<8x384xf32>
    %17 = vector.broadcast %6 : vector<1x384xf32> to vector<8x384xf32>
    %18 = arith.mulf %16, %17 : vector<8x384xf32>
    %cst_8 = arith.constant dense<0.000000e+00> : vector<8xf32>
    %19 = vector.multi_reduction <add>, %18, %cst_8 [1] : vector<8x384xf32> to vector<8xf32>
    %20 = vector.shape_cast %19 : vector<8xf32> to vector<8x1xf32>
    %cst_9 = arith.constant 3.906250e-03 : f32
    %21 = vector.broadcast %cst_9 : f32 to vector<8x1xf32>
    %22 = arith.mulf %20, %21 : vector<8x1xf32>
    %cst_10 = arith.constant 9.99999974E-6 : f32
    %23 = vector.broadcast %cst_10 : f32 to vector<8x1xf32>
    %24 = arith.addf %22, %23 : vector<8x1xf32>
    %25 = math.rsqrt %24 : vector<8x1xf32>
    %26 = vector.broadcast %25 : vector<8x1xf32> to vector<8x384xf32>
    %27 = arith.mulf %15, %26 : vector<8x384xf32>
    %c0_11 = arith.constant 0 : index
    %c0_12 = arith.constant 0 : index
    %28 = vector.load %arg5[%c0_11, %c0_12] : memref<8x1xf32, #tpu.memory_space<vmem>>, vector<8x1xf32>
    %29 = vector.broadcast %28 : vector<8x1xf32> to vector<8x384xf32>
    %30 = arith.mulf %27, %29 : vector<8x384xf32>
    %c0_13 = arith.constant 0 : index
    %c0_14 = arith.constant 0 : index
    %31 = vector.load %arg6[%c0_13, %c0_14] : memref<8x1xf32, #tpu.memory_space<vmem>>, vector<8x1xf32>
    %32 = vector.broadcast %31 : vector<8x1xf32> to vector<8x384xf32>
    %33 = arith.addf %30, %32 : vector<8x384xf32>
    %34 = vector.extract_strided_slice %4 {offsets = [8, 0], sizes = [8, 384], strides = [1, 1]} : vector<16x384xf32> to vector<8x384xf32>
    %35 = tpu.concatenate %33, %34 in 0 : vector<8x384xf32>, vector<8x384xf32> -> vector<16x384xf32>
    %cst_15 = arith.constant 0.000000e+00 : f32
    %36 = vector.broadcast %cst_15 : f32 to vector<16x384xf32>
    %37 = arith.cmpf oge, %35, %36 : vector<16x384xf32>
    %cst_16 = arith.constant 1.000000e-01 : f32
    %38 = vector.broadcast %cst_16 : f32 to vector<16x384xf32>
    %39 = arith.mulf %38, %35 : vector<16x384xf32>
    %40 = arith.select %37, %35, %39 : vector<16x384xi1>, vector<16x384xf32>
    %41 = vector.broadcast %6 : vector<1x384xf32> to vector<16x384xf32>
    %42 = arith.mulf %40, %41 : vector<16x384xf32>
    %43 = arith.truncf %42 : vector<16x384xf32> to vector<16x384xbf16>
    %c0_17 = arith.constant 0 : index
    %c147 = arith.constant 147 : index
    %44 = vector.load %arg9[%c0_17, %c147] : memref<144x640xbf16, #tpu.memory_space<vmem>>, vector<16x384xbf16>
    tpu.vector_store %arg9[%c0_17, %c147], %43 {strides = array<i32>} : memref<144x640xbf16, #tpu.memory_space<vmem>>, vector<16x384xbf16>,
    %c16 = arith.constant 16 : index
    %c146 = arith.constant 146 : index
    %45 = vector.load %arg9[%c16, %c146] : memref<144x640xbf16, #tpu.memory_space<vmem>>, vector<16x384xbf16>
    tpu.vector_store %arg9[%c16, %c146], %43 {strides = array<i32>} : memref<144x640xbf16, #tpu.memory_space<vmem>>, vector<16x384xbf16>,
    %c32 = arith.constant 32 : index
    %c145 = arith.constant 145 : index
    %46 = vector.load %arg9[%c32, %c145] : memref<144x640xbf16, #tpu.memory_space<vmem>>, vector<16x384xbf16>
    tpu.vector_store %arg9[%c32, %c145], %43 {strides = array<i32>} : memref<144x640xbf16, #tpu.memory_space<vmem>>, vector<16x384xbf16>,
    %c48 = arith.constant 48 : index
    %c129 = arith.constant 129 : index
    %47 = vector.load %arg9[%c48, %c129] : memref<144x640xbf16, #tpu.memory_space<vmem>>, vector<16x384xbf16>
    tpu.vector_store %arg9[%c48, %c129], %43 {strides = array<i32>} : memref<144x640xbf16, #tpu.memory_space<vmem>>, vector<16x384xbf16>,
    %c64 = arith.constant 64 : index
    %c128 = arith.constant 128 : index
    %48 = vector.load %arg9[%c64, %c128] : memref<144x640xbf16, #tpu.memory_space<vmem>>, vector<16x384xbf16>
    tpu.vector_store %arg9[%c64, %c128], %43 {strides = array<i32>} : memref<144x640xbf16, #tpu.memory_space<vmem>>, vector<16x384xbf16>,
    %c80 = arith.constant 80 : index
    %c127 = arith.constant 127 : index
    %49 = vector.load %arg9[%c80, %c127] : memref<144x640xbf16, #tpu.memory_space<vmem>>, vector<16x384xbf16>
    tpu.vector_store %arg9[%c80, %c127], %43 {strides = array<i32>} : memref<144x640xbf16, #tpu.memory_space<vmem>>, vector<16x384xbf16>,
    %c96 = arith.constant 96 : index
    %c111 = arith.constant 111 : index
    %50 = vector.load %arg9[%c96, %c111] : memref<144x640xbf16, #tpu.memory_space<vmem>>, vector<16x384xbf16>
    tpu.vector_store %arg9[%c96, %c111], %43 {strides = array<i32>} : memref<144x640xbf16, #tpu.memory_space<vmem>>, vector<16x384xbf16>,
    %c112 = arith.constant 112 : index
    %c110 = arith.constant 110 : index
    %51 = vector.load %arg9[%c112, %c110] : memref<144x640xbf16, #tpu.memory_space<vmem>>, vector<16x384xbf16>
    tpu.vector_store %arg9[%c112, %c110], %43 {strides = array<i32>} : memref<144x640xbf16, #tpu.memory_space<vmem>>, vector<16x384xbf16>,
    %c128_18 = arith.constant 128 : index
    %c109 = arith.constant 109 : index
    %52 = vector.load %arg9[%c128_18, %c109] : memref<144x640xbf16, #tpu.memory_space<vmem>>, vector<16x384xbf16>
    tpu.vector_store %arg9[%c128_18, %c109], %43 {strides = array<i32>} : memref<144x640xbf16, #tpu.memory_space<vmem>>, vector<16x384xbf16>,
    %c0_19 = arith.constant 0 : index
    %c0_20 = arith.constant 0 : index
    %53 = vector.load %arg3[%c0_19, %c0_20] : memref<16x144xbf16, #tpu.memory_space<vmem>>, vector<16x144xbf16>
    %c0_21 = arith.constant 0 : index
    %c128_22 = arith.constant 128 : index
    %54 = vector.load %arg9[%c0_21, %c128_22] : memref<144x640xbf16, #tpu.memory_space<vmem>>, vector<144x384xbf16>
    %cst_23 = arith.constant dense<0.000000e+00> : vector<16x384xf32>
    %55 = tpu.matmul %53, %54, %cst_23 {dimension_numbers = #tpu.dot_dimension_numbers<[1], [0], [0], [1], [0, 0, 1, 1], [], []>} : vector<16x144xbf16>, vector<144x384xbf16>, vector<16x384xf32> -> vector<16x384xf32>
    %c0_24 = arith.constant 0 : index
    %c0_25 = arith.constant 0 : index
    %56 = vector.load %arg4[%c0_24, %c0_25] : memref<16x1xf32, #tpu.memory_space<vmem>>, vector<16x1xf32>
    %57 = vector.broadcast %56 : vector<16x1xf32> to vector<16x384xf32>
    %58 = arith.addf %55, %57 : vector<16x384xf32>
    %cst_26 = arith.constant 0.000000e+00 : f32
    %59 = vector.broadcast %cst_26 : f32 to vector<16x384xf32>
    %60 = arith.cmpf oge, %58, %59 : vector<16x384xf32>
    %cst_27 = arith.constant 1.000000e-01 : f32
    %61 = vector.broadcast %cst_27 : f32 to vector<16x384xf32>
    %62 = arith.mulf %61, %58 : vector<16x384xf32>
    %63 = arith.select %60, %58, %62 : vector<16x384xi1>, vector<16x384xf32>
    %64 = arith.addf %63, %5 : vector<16x384xf32>
    %c0_28 = arith.constant 0 : index
    %c0_29 = arith.constant 0 : index
    %c0_30 = arith.constant 0 : index
    %65 = vector.load %arg8[%c0_28, %c0_29, %c0_30] : memref<1x16x384xf32, #tpu.memory_space<vmem>>, vector<1x16x384xf32>
    %66 = vector.shape_cast %65 : vector<1x16x384xf32> to vector<16x384xf32>
    %67 = vector.shape_cast %64 : vector<16x384xf32> to vector<1x16x384xf32>
    tpu.vector_store %arg8[%c0_28, %c0_29, %c0_30], %67 {strides = array<i32>} : memref<1x16x384xf32, #tpu.memory_space<vmem>>, vector<1x16x384xf32>,
    return
  }
  func.func @transform_0(%arg0: i32) -> (i32, i32, i32) {
    %c0_i32 = arith.constant 0 : i32
    %c0_i32_0 = arith.constant 0 : i32
    %c0_i32_1 = arith.constant 0 : i32
    return %arg0, %c0_i32, %c0_i32_0 : i32, i32, i32
  }
  func.func @transform_1(%arg0: i32) -> (i32, i32) {
    %c0_i32 = arith.constant 0 : i32
    %c0_i32_0 = arith.constant 0 : i32
    %c0_i32_1 = arith.constant 0 : i32
    return %c0_i32, %c0_i32_0 : i32, i32
  }
  func.func @transform_2(%arg0: i32) -> (i32, i32) {
    %c0_i32 = arith.constant 0 : i32
    %c0_i32_0 = arith.constant 0 : i32
    %c0_i32_1 = arith.constant 0 : i32
    return %c0_i32, %c0_i32_0 : i32, i32
  }
  func.func @transform_3(%arg0: i32) -> (i32, i32) {
    %c0_i32 = arith.constant 0 : i32
    %c0_i32_0 = arith.constant 0 : i32
    %c0_i32_1 = arith.constant 0 : i32
    return %c0_i32, %c0_i32_0 : i32, i32
  }
  func.func @transform_4(%arg0: i32) -> (i32, i32) {
    %c0_i32 = arith.constant 0 : i32
    %c0_i32_0 = arith.constant 0 : i32
    %c0_i32_1 = arith.constant 0 : i32
    return %c0_i32, %c0_i32_0 : i32, i32
  }
  func.func @transform_5(%arg0: i32) -> (i32, i32) {
    %c0_i32 = arith.constant 0 : i32
    %c0_i32_0 = arith.constant 0 : i32
    %c0_i32_1 = arith.constant 0 : i32
    return %c0_i32, %c0_i32_0 : i32, i32
  }
  func.func @transform_6(%arg0: i32) -> (i32, i32) {
    %c0_i32 = arith.constant 0 : i32
    %c0_i32_0 = arith.constant 0 : i32
    %c0_i32_1 = arith.constant 0 : i32
    return %c0_i32, %c0_i32_0 : i32, i32
  }
  func.func @transform_7(%arg0: i32) -> (i32, i32, i32) {
    %c0_i32 = arith.constant 0 : i32
    %c0_i32_0 = arith.constant 0 : i32
    %c0_i32_1 = arith.constant 0 : i32
    return %arg0, %c0_i32, %c0_i32_0 : i32, i32, i32
  }
}

</mosaic_0001>

<llo_original>
// kernel: unet_conv_block.1
$region0: #{unet_conv_block.1}
  #allocation0 [shape = 'u32[]', space=smem, size = 0x4, offset = 0x4, fixed_abs, tag = 'smem constant byte address 0x4 - core index']
  #allocation1 [shape = 'u32[144,128]{1,0:T(1,128)}', space=vmem, size = 0x12000, scoped, tag = 'internal scratch']
  #allocation2 [shape = 'bf16[144,640]{1,0:T(16,128)(2,1)}', space=vmem, size = 0x2d000, scoped, tag = 'scratch operand']
  %s0 = inlined_call_operand.vmem [shape: bf16[2,37,384], index: 0, kind: input, shape index: {}]
  %s1 = inlined_call_operand.vmem [shape: bf16[32,37], index: 1, kind: input, shape index: {}]
  %s2 = inlined_call_operand.vmem [shape: bf16[16,144], index: 2, kind: input, shape index: {}]
  %s3 = inlined_call_operand.vmem [shape: f32[16,1], index: 3, kind: input, shape index: {}]
  %s4 = inlined_call_operand.vmem [shape: f32[8,1], index: 4, kind: input, shape index: {}]
  %s5 = inlined_call_operand.vmem [shape: f32[8,1], index: 5, kind: input, shape index: {}]
  %s6 = inlined_call_operand.vmem [shape: f32[1,384], index: 6, kind: input, shape index: {}]
  %s7 = inlined_call_operand.vmem [shape: f32[2,16,384], index: 7, kind: output, shape index: {}]
  %s8 = sld [smem:[#allocation0]]
  $region61: #{unet_conv_block.1} parent=0
    _
  %s10 = ssub.s32 1, %s8
  %s11 = scalar_select 0, %s10, %s8
  loop: start=0, step=1, limit=4
  $region2: #{unet_conv_block.1} parent=0 // loop_pre_header
    _
  $region3: #{unet_conv_block.1} parent=0 // loop_header
    %s13 = sphi 0, %s17
    %p14 = scmp.ge.s32.totalorder %s13, 4
    %s23 = sphi 0, %s25
    %s26 = sphi 0, %s23
    %s27 = sphi 0, %s26
    %s43 = sphi 0, %s27
    %s47 = sphi 0, %s47
    %s49 = sphi 0, %s47
    %s50 = sphi 0, %s49
    %s64 = sphi 0, %s50
    %s68 = sphi 0, %s68
    %s70 = sphi 0, %s68
    %s71 = sphi 0, %s70
    %s85 = sphi 0, %s71
    %s89 = sphi 0, %s89
    %s91 = sphi 0, %s89
    %s92 = sphi 0, %s91
    %s106 = sphi 0, %s92
    %s110 = sphi 0, %s110
    %s112 = sphi 0, %s110
    %s113 = sphi 0, %s112
    %s127 = sphi 0, %s113
    %s131 = sphi 0, %s131
    %s133 = sphi 0, %s131
    %s134 = sphi 0, %s133
    %s148 = sphi 0, %s134
    %s152 = sphi 0, %s152
    %s154 = sphi 0, %s152
    %s155 = sphi 0, %s154
    %s169 = sphi 0, %s155
    %s175 = sphi 0, %s177
    %s178 = sphi 0, %s175
    %s179 = sphi 0, %s178
    %s195 = sphi 0, %s179
  $region4: #{unet_conv_block.1} parent=0 // loop_header_branch
    %16 = sbr.rel (%p14) target = $region8
  $region5: #{unet_conv_block.1} parent=0 // loop_body
    %s18 = ssub.s32 %s13, 1
    %s19 = ssub.s32 %s13, 2
    %s20 = sadd.s32 %s13, 1
    %s21 = ssub.s32 %s13, %s20
    %p22 = scmp.eq.s32.totalorder %s21, 0
    %s24 = sadd.s32 %s23, 1
    %s25 = scalar_select %p22, %s23, %s24
    %p28 = pneg %p22
    %p29 = scmp.eq.s32.totalorder %s13, 1
    %p30 = por %p28, %p29
    %p31 = scmp.ne.s32.totalorder %s23, %s26
    %p32 = scmp.eq.s32.totalorder %s13, 0
    %p33 = por %p31, %p32
    %p34 = scmp.ne.s32.totalorder %s23, %s26
    %p35 = scmp.eq.s32.totalorder %s18, 1
    %p36 = por %p34, %p35
    %p37 = scmp.ne.s32.totalorder %s26, %s27
    %p38 = scmp.eq.s32.totalorder %s18, 0
    %p39 = por %p37, %p38
    %p40 = scmp.ne.s32.totalorder %s26, %s27
    %p41 = scmp.eq.s32.totalorder %s19, 1
    %p42 = por %p40, %p41
    %p44 = scmp.ne.s32.totalorder %s27, %s43
    %p45 = scmp.eq.s32.totalorder %s19, 0
    %p46 = por %p44, %p45
    %s48 = sadd.s32 %s47, 1
    %p51 = scmp.eq.s32.totalorder %s13, 1
    %p52 = scmp.ne.s32.totalorder %s47, %s49
    %p53 = scmp.eq.s32.totalorder %s13, 0
    %p54 = por %p52, %p53
    %p55 = scmp.ne.s32.totalorder %s47, %s49
    %p56 = scmp.eq.s32.totalorder %s18, 1
    %p57 = por %p55, %p56
    %p58 = scmp.ne.s32.totalorder %s49, %s50
    %p59 = scmp.eq.s32.totalorder %s18, 0
    %p60 = por %p58, %p59
    %p61 = scmp.ne.s32.totalorder %s49, %s50
    %p62 = scmp.eq.s32.totalorder %s19, 1
    %p63 = por %p61, %p62
    %p65 = scmp.ne.s32.totalorder %s50, %s64
    %p66 = scmp.eq.s32.totalorder %s19, 0
    %p67 = por %p65, %p66
    %s69 = sadd.s32 %s68, 1
    %p72 = scmp.eq.s32.totalorder %s13, 1
    %p73 = scmp.ne.s32.totalorder %s68, %s70
    %p74 = scmp.eq.s32.totalorder %s13, 0
    %p75 = por %p73, %p74
    %p76 = scmp.ne.s32.totalorder %s68, %s70
    %p77 = scmp.eq.s32.totalorder %s18, 1
    %p78 = por %p76, %p77
    %p79 = scmp.ne.s32.totalorder %s70, %s71
    %p80 = scmp.eq.s32.totalorder %s18, 0
    %p81 = por %p79, %p80
    %p82 = scmp.ne.s32.totalorder %s70, %s71
    %p83 = scmp.eq.s32.totalorder %s19, 1
    %p84 = por %p82, %p83
    %p86 = scmp.ne.s32.totalorder %s71, %s85
    %p87 = scmp.eq.s32.totalorder %s19, 0
    %p88 = por %p86, %p87
    %s90 = sadd.s32 %s89, 1
    %p93 = scmp.eq.s32.totalorder %s13, 1
    %p94 = scmp.ne.s32.totalorder %s89, %s91
    %p95 = scmp.eq.s32.totalorder %s13, 0
    %p96 = por %p94, %p95
    %p97 = scmp.ne.s32.totalorder %s89, %s91
    %p98 = scmp.eq.s32.totalorder %s18, 1
    %p99 = por %p97, %p98
    %p100 = scmp.ne.s32.totalorder %s91, %s92
    %p101 = scmp.eq.s32.totalorder %s18, 0
    %p102 = por %p100, %p101
    %p103 = scmp.ne.s32.totalorder %s91, %s92
    %p104 = scmp.eq.s32.totalorder %s19, 1
    %p105 = por %p103, %p104
    %p107 = scmp.ne.s32.totalorder %s92, %s106
    %p108 = scmp.eq.s32.totalorder %s19, 0
    %p109 = por %p107, %p108
    %s111 = sadd.s32 %s110, 1
    %p114 = scmp.eq.s32.totalorder %s13, 1
    %p115 = scmp.ne.s32.totalorder %s110, %s112
    %p116 = scmp.eq.s32.totalorder %s13, 0
    %p117 = por %p115, %p116
    %p118 = scmp.ne.s32.totalorder %s110, %s112
    %p119 = scmp.eq.s32.totalorder %s18, 1
    %p120 = por %p118, %p119
    %p121 = scmp.ne.s32.totalorder %s112, %s113
    %p122 = scmp.eq.s32.totalorder %s18, 0
    %p123 = por %p121, %p122
    %p124 = scmp.ne.s32.totalorder %s112, %s113
    %p125 = scmp.eq.s32.totalorder %s19, 1
    %p126 = por %p124, %p125
    %p128 = scmp.ne.s32.totalorder %s113, %s127
    %p129 = scmp.eq.s32.totalorder %s19, 0
    %p130 = por %p128, %p129
    %s132 = sadd.s32 %s131, 1
    %p135 = scmp.eq.s32.totalorder %s13, 1
    %p136 = scmp.ne.s32.totalorder %s131, %s133
    %p137 = scmp.eq.s32.totalorder %s13, 0
    %p138 = por %p136, %p137
    %p139 = scmp.ne.s32.totalorder %s131, %s133
    %p140 = scmp.eq.s32.totalorder %s18, 1
    %p141 = por %p139, %p140
    %p142 = scmp.ne.s32.totalorder %s133, %s134
    %p143 = scmp.eq.s32.totalorder %s18, 0
    %p144 = por %p142, %p143
    %p145 = scmp.ne.s32.totalorder %s133, %s134
    %p146 = scmp.eq.s32.totalorder %s19, 1
    %p147 = por %p145, %p146
    %p149 = scmp.ne.s32.totalorder %s134, %s148
    %p150 = scmp.eq.s32.totalorder %s19, 0
    %p151 = por %p149, %p150
    %s153 = sadd.s32 %s152, 1
    %p156 = scmp.eq.s32.totalorder %s13, 1
    %p157 = scmp.ne.s32.totalorder %s152, %s154
    %p158 = scmp.eq.s32.totalorder %s13, 0
    %p159 = por %p157, %p158
    %p160 = scmp.ne.s32.totalorder %s152, %s154
    %p161 = scmp.eq.s32.totalorder %s18, 1
    %p162 = por %p160, %p161
    %p163 = scmp.ne.s32.totalorder %s154, %s155
    %p164 = scmp.eq.s32.totalorder %s18, 0
    %p165 = por %p163, %p164
    %p166 = scmp.ne.s32.totalorder %s154, %s155
    %p167 = scmp.eq.s32.totalorder %s19, 1
    %p168 = por %p166, %p167
    %p170 = scmp.ne.s32.totalorder %s155, %s169
    %p171 = scmp.eq.s32.totalorder %s19, 0
    %p172 = por %p170, %p171
    %s173 = ssub.s32 %s13, %s20
    %p174 = scmp.eq.s32.totalorder %s173, 0
    %s176 = sadd.s32 %s175, 1
    %s177 = scalar_select %p174, %s175, %s176
    %p180 = pneg %p174
    %p181 = scmp.eq.s32.totalorder %s13, 1
    %p182 = por %p180, %p181
    %p183 = scmp.ne.s32.totalorder %s175, %s178
    %p184 = scmp.eq.s32.totalorder %s13, 0
    %p185 = por %p183, %p184
    %p186 = scmp.ne.s32.totalorder %s175, %s178
    %p187 = scmp.eq.s32.totalorder %s18, 1
    %p188 = por %p186, %p187
    %p189 = scmp.ne.s32.totalorder %s178, %s179
    %p190 = scmp.eq.s32.totalorder %s18, 0
    %p191 = por %p189, %p190
    %p192 = scmp.ne.s32.totalorder %s178, %s179
    %p193 = scmp.eq.s32.totalorder %s19, 1
    %p194 = por %p192, %p193
    %p196 = scmp.ne.s32.totalorder %s179, %s195
    %p197 = scmp.eq.s32.totalorder %s19, 0
    %p198 = por %p196, %p197
    %p199 = scmp.le.s32.totalorder 1, %s13
    %p200 = scmp.lt.s32.totalorder %s13, 3
    %p201 = pnand %p199, %p200
    %p202 = pneg %p201
    // Predicated region
    $region9: #{unet_conv_block.1} parent=5 // pred_check
      _
    $region10: #{unet_conv_block.1} parent=5 // pred_check_branch
      %204 = sbr.rel (%p201) target = $region12
    $region11: #{unet_conv_block.1} parent=5 // pred_region
      %s205 = ssub.s32 %s13, 1
      // Predicated region
      $region13: #{unet_conv_block.1} parent=11 // pred_check
        %p206 = pneg %p60
      $region14: #{unet_conv_block.1} parent=11 // pred_check_branch
        %208 = sbr.rel (%p206) target = $region16
      $region15: #{unet_conv_block.1} parent=11 // pred_region
        _
      $region16: #{unet_conv_block.1} parent=11 // pred_fallthru
        _
      // Predicated region
      $region17: #{unet_conv_block.1} parent=11 // pred_check
        %p209 = pneg %p81
      $region18: #{unet_conv_block.1} parent=11 // pred_check_branch
        %211 = sbr.rel (%p209) target = $region20
      $region19: #{unet_conv_block.1} parent=11 // pred_region
        _
      $region20: #{unet_conv_block.1} parent=11 // pred_fallthru
        _
      // Predicated region
      $region21: #{unet_conv_block.1} parent=11 // pred_check
        %p212 = pneg %p102
      $region22: #{unet_conv_block.1} parent=11 // pred_check_branch
        %214 = sbr.rel (%p212) target = $region24
      $region23: #{unet_conv_block.1} parent=11 // pred_region
        _
      $region24: #{unet_conv_block.1} parent=11 // pred_fallthru
        _
      // Predicated region
      $region25: #{unet_conv_block.1} parent=11 // pred_check
        %p215 = pneg %p123
      $region26: #{unet_conv_block.1} parent=11 // pred_check_branch
        %217 = sbr.rel (%p215) target = $region28
      $region27: #{unet_conv_block.1} parent=11 // pred_region
        _
      $region28: #{unet_conv_block.1} parent=11 // pred_fallthru
        _
      // Predicated region
      $region29: #{unet_conv_block.1} parent=11 // pred_check
        %p218 = pneg %p144
      $region30: #{unet_conv_block.1} parent=11 // pred_check_branch
        %220 = sbr.rel (%p218) target = $region32
      $region31: #{unet_conv_block.1} parent=11 // pred_region
        _
      $region32: #{unet_conv_block.1} parent=11 // pred_fallthru
        _
      // Predicated region
      $region33: #{unet_conv_block.1} parent=11 // pred_check
        %p221 = pneg %p165
      $region34: #{unet_conv_block.1} parent=11 // pred_check_branch
        %223 = sbr.rel (%p221) target = $region36
      $region35: #{unet_conv_block.1} parent=11 // pred_region
        _
      $region36: #{unet_conv_block.1} parent=11 // pred_fallthru
        _
    $region12: #{unet_conv_block.1} parent=5 // pred_fallthru
      _
    %p224 = scmp.lt.s32.totalorder %s13, 2
    // Predicated region
    $region37: #{unet_conv_block.1} parent=5 // pred_check
      %p225 = pneg %p224
    $region38: #{unet_conv_block.1} parent=5 // pred_check_branch
      %227 = sbr.rel (%p225) target = $region40
    $region39: #{unet_conv_block.1} parent=5 // pred_region
      // Predicated region
      $region41: #{unet_conv_block.1} parent=39 // pred_check
        %p228 = pneg %p33
      $region42: #{unet_conv_block.1} parent=39 // pred_check_branch
        %230 = sbr.rel (%p228) target = $region44
      $region43: #{unet_conv_block.1} parent=39 // pred_region
        %p231 = scmp.lt.s32.totalorder %s13, 1
        %s232 = scalar_select %p231, %s13, 1
        %s233 = smul.addr %s232, 15
        %s234 = smul.addr %s233, 4
        %s235 = scalar_lea.vmem %s0, %s234
      $region44: #{unet_conv_block.1} parent=39 // pred_fallthru
        _
    $region40: #{unet_conv_block.1} parent=5 // pred_fallthru
      _
    %p236 = scmp.le.s32.totalorder 1, %s13
    %p237 = scmp.lt.s32.totalorder %s13, 3
    %p238 = pnand %p236, %p237
    %p239 = pneg %p238
    // Predicated region
    $region45: #{unet_conv_block.1} parent=5 // pred_check
      _
    $region46: #{unet_conv_block.1} parent=5 // pred_check_branch
      %241 = sbr.rel (%p238) target = $region48
    $region47: #{unet_conv_block.1} parent=5 // pred_region
      %s242 = ssub.s32 %s13, 1
      %p243 = scmp.lt.s32.totalorder %s18, 1
      %s244 = scalar_select %p243, %s18, 1
      %s245 = smul.addr %s244, 15
      %s246 = smul.addr %s245, 4
      %s247 = scalar_lea.vmem %s0, %s246
      %p248 = pneg %p39
      %p249 = pneg %p36
      %p250 = pneg %p60
      %p251 = pneg %p57
      %p252 = pneg %p81
      %p253 = pneg %p78
      %p254 = pneg %p102
      %p255 = pneg %p99
      %p256 = pneg %p123
      %p257 = pneg %p120
      %p258 = pneg %p144
      %p259 = pneg %p141
      %p260 = pneg %p165
      %p261 = pneg %p162
      %p262 = pneg %p191
      %p263 = pneg %p188
      %p264 = scmp.lt.s32.totalorder %s18, 1
      %s265 = scalar_select %p264, %s18, 1
      %s266 = smul.addr %s265, 6
      %s267 = smul.addr %s266, 8
      %s268 = scalar_lea.vmem %s7, %s267
      %p269 = scmp.lt.s32.totalorder %s18, 1
      %s270 = scalar_select %p269, %s18, 1
      %s271 = smul.addr %s270, 15
      %s272 = smul.addr %s271, 4
      %s273 = scalar_lea.vmem %s0, %s272
      %p274 = scmp.lt.s32.totalorder %s18, 1
      %s275 = scalar_select %p274, %s18, 1
      %s276 = smul.addr %s275, 6
      %s277 = smul.addr %s276, 8
      %s278 = scalar_lea.vmem %s7, %s277
      %v280 = vld [vmem:[%s1] sm:$0xf]
      %v281 = vld [vmem:[%s1 + $0x4] sm:$0xf]
      %v282 = vld [vmem:[%s1 + $0x8] sm:$0xf]
      %v283 = vld [vmem:[%s1 + $0xc] sm:$0xf]
      %v284 = vld [vmem:[%s273] sm:$0xff]
      %v285 = vld [vmem:[%s273 + $0x8] sm:$0xf]
      %v286 = vld [vmem:[%s273 + $0xc] sm:$0xff]
      %v287 = vld [vmem:[%s273 + $0x14] sm:$0xf]
      %v288 = vld [vmem:[%s273 + $0x18] sm:$0xff]
      %v289 = vld [vmem:[%s273 + $0x20] sm:$0xf]
      %v290 = vld [vmem:[%s273 + $0x24] sm:$0xff]
      %v291 = vld [vmem:[%s273 + $0x2c] sm:$0xf]
      %v292 = vld [vmem:[%s273 + $0x30] sm:$0x77]
      %v293 = vld [vmem:[%s273 + $0x38] sm:$0x7]
      %v298 = vunpack.c.l.b16 %v280
      %v299 = vunpack.c.l.b16 %v281
      %v300 = vunpack.c.l.b16 %v282
      %v301 = vunpack.c.l.b16 %v283
      %v302 = vpack.c.b16 %v299, %v298
      %v303 = vpack.c.b16 %v301, %v300
      %v314 = vunpack.c.l.b16 %v284
      %v315 = vunpack.c.h.b16 %v284
      %v316 = vunpack.c.l.b16 %v285
      %v317 = vunpack.c.l.b16 %v286
      %v318 = vunpack.c.h.b16 %v286
      %v319 = vunpack.c.l.b16 %v287
      %v320 = vunpack.c.l.b16 %v288
      %v321 = vunpack.c.h.b16 %v288
      %v322 = vunpack.c.l.b16 %v289
      %v323 = vunpack.c.l.b16 %v290
      %v324 = vunpack.c.h.b16 %v290
      %v325 = vunpack.c.l.b16 %v291
      %v326 = vunpack.c.l.b16 %v292
      %v327 = vunpack.c.h.b16 %v292
      %v328 = vunpack.c.l.b16 %v293
      %v329 = vpack.c.b16 %v317, %v314
      %v330 = vpack.c.b16 %v318, %v315
      %v331 = vpack.c.b16 %v319, %v316
      %v332 = vpack.c.b16 %v323, %v320
      %v333 = vpack.c.b16 %v324, %v321
      %v334 = vpack.c.b16 %v325, %v322
      %v335 = vpack.c.b16 %v326, %v326
      %v336 = vpack.c.b16 %v327, %v327
      %v337 = vpack.c.b16 %v328, %v328
      %vm344 = vcmask 302080
      %v346 = vsel %vm344, %v302, 0
      %v349 = vsel %vm344, %v303, 0
      %vm351 = vcmask 1041408
      %vm352 = vcmask 1042432
      %v353 = vsel %vm351, 4294967295, 65535
      %v354 = vsel %vm352, %v353, 0
      %v356 = vand.u32 %v335, %v354
      %v359 = vand.u32 %v336, %v354
      %v362 = vand.u32 %v337, %v354
      %364 = vmatprep.subr.bf16.mxu0 %v330
      %365 = vmatpush1.bf16.msra.mxu0 %v329
      %366 = vmatprep.subr.bf16.mxu0 %v333
      %367 = vmatpush1.bf16.msra.mxu0 %v332
      %368 = vmatprep.subr.bf16.mxu0 %v359
      %369 = vmatpush1.bf16.msra.mxu0 %v356
      %370 = vmatprep.subr.bf16.mxu0 0
      %371 = vmatpush1.bf16.msra.mxu0 0
      %372 = vmatprep.subr.bf16.mxu0 0
      %373 = vmatpush1.bf16.msra.mxu0 0
      %374 = vmatprep.subr.bf16.mxu0 0
      %375 = vmatpush1.bf16.msra.mxu0 0
      %376 = vmatprep.subr.bf16.mxu0 0
      %377 = vmatpush1.bf16.msra.mxu0 0
      %378 = vmatprep.subr.bf16.mxu0 0
      %379 = vmatpush1.bf16.msra.mxu0 0
      %380 = vmatprep.subr.bf16.mxu0 0
      %381 = vmatpush1.bf16.msra.mxu0 0
      %382 = vmatprep.subr.bf16.mxu0 0
      %383 = vmatpush1.bf16.msra.mxu0 0
      %384 = vmatprep.subr.bf16.mxu0 0
      %385 = vmatpush1.bf16.msra.mxu0 0
      %386 = vmatprep.subr.bf16.mxu0 0
      %387 = vmatpush1.bf16.msra.mxu0 0
      %388 = vmatprep.subr.bf16.mxu0 0
      %389 = vmatpush1.bf16.msra.mxu0 0
      %390 = vmatprep.subr.bf16.mxu0 0
      %391 = vmatpush1.bf16.msra.mxu0 0
      %392 = vmatprep.subr.bf16.mxu0 0
      %393 = vmatpush1.bf16.msra.mxu0 0
      %394 = vmatprep.subr.bf16.mxu0 0
      %395 = vmatpush1.bf16.msra.mxu0 0
      %396 = vmatprep.mubr.bf16.mxu0 0
      %397 = vmatmul.mubr.bf16.gmra.mrb[0].mxu0 %v346
      %v398 = vpop.f32.mrb[0].mxu0
      %v399 = vadd.f32 0.0, %v398
      %v400 = vpop.f32.mrb[0].mxu0
      %v401 = vadd.f32 0.0, %v400
      %v402 = vpop.f32.mrb[0].mxu0
      %v403 = vadd.f32 0.0, %v402
      %v404 = vpop.f32.mrb[0].mxu0
      %v405 = vadd.f32 0.0, %v404
      %406 = vmatprep.mubr.bf16.mxu0 0
      %407 = vmatmul.mubr.bf16.gmra.mrb[0].mxu0 %v349
      %v408 = vpop.f32.mrb[0].mxu0
      %v409 = vadd.f32 0.0, %v408
      %v410 = vpop.f32.mrb[0].mxu0
      %v411 = vadd.f32 0.0, %v410
      %v412 = vpop.f32.mrb[0].mxu0
      %v413 = vadd.f32 0.0, %v412
      %v414 = vpop.f32.mrb[0].mxu0
      %v415 = vadd.f32 0.0, %v414
      %416 = vdwg.mxu0
      %417 = vmatprep.subr.bf16.mxu0 0
      %418 = vmatpush1.bf16.msra.mxu0 %v331
      %419 = vmatprep.subr.bf16.mxu0 0
      %420 = vmatpush1.bf16.msra.mxu0 %v334
      %421 = vmatprep.subr.bf16.mxu0 0
      %422 = vmatpush1.bf16.msra.mxu0 %v362
      %423 = vmatprep.subr.bf16.mxu0 0
      %424 = vmatpush1.bf16.msra.mxu0 0
      %425 = vmatprep.subr.bf16.mxu0 0
      %426 = vmatpush1.bf16.msra.mxu0 0
      %427 = vmatprep.subr.bf16.mxu0 0
      %428 = vmatpush1.bf16.msra.mxu0 0
      %429 = vmatprep.subr.bf16.mxu0 0
      %430 = vmatpush1.bf16.msra.mxu0 0
      %431 = vmatprep.subr.bf16.mxu0 0
      %432 = vmatpush1.bf16.msra.mxu0 0
      %433 = vmatprep.subr.bf16.mxu0 0
      %434 = vmatpush1.bf16.msra.mxu0 0
      %435 = vmatprep.subr.bf16.mxu0 0
      %436 = vmatpush1.bf16.msra.mxu0 0
      %437 = vmatprep.subr.bf16.mxu0 0
      %438 = vmatpush1.bf16.msra.mxu0 0
      %439 = vmatprep.subr.bf16.mxu0 0
      %440 = vmatpush1.bf16.msra.mxu0 0
      %441 = vmatprep.subr.bf16.mxu0 0
      %442 = vmatpush1.bf16.msra.mxu0 0
      %443 = vmatprep.subr.bf16.mxu0 0
      %444 = vmatpush1.bf16.msra.mxu0 0
      %445 = vmatprep.subr.bf16.mxu0 0
      %446 = vmatpush1.bf16.msra.mxu0 0
      %447 = vmatprep.subr.bf16.mxu0 0
      %448 = vmatpush1.bf16.msra.mxu0 0
      %449 = vmatprep.mubr.bf16.mxu0 0
      %450 = vmatmul.mubr.bf16.gmra.mrb[0].mxu0 %v346
      %v451 = vpop.f32.mrb[0].mxu0
      %v452 = vadd.f32 0.0, %v451
      %v453 = vpop.f32.mrb[0].mxu0
      %v454 = vpop.f32.mrb[0].mxu0
      %v455 = vadd.f32 0.0, %v454
      %v456 = vpop.f32.mrb[0].mxu0
      %457 = vmatprep.mubr.bf16.mxu0 0
      %458 = vmatmul.mubr.bf16.gmra.mrb[0].mxu0 %v349
      %v459 = vpop.f32.mrb[0].mxu0
      %v460 = vadd.f32 0.0, %v459
      %v461 = vpop.f32.mrb[0].mxu0
      %v462 = vpop.f32.mrb[0].mxu0
      %v463 = vadd.f32 0.0, %v462
      %v464 = vpop.f32.mrb[0].mxu0
      %465 = vdwg.mxu0
      %v466 = vld [vmem:[%s6] sm:$0x7]
      %v468 = vlaneseq
      %v469 = vshrl.u32 %v468, 7
      %v470 = vsub.s32 0, %v469
      %v471 = vrot.slane %v466, %v470
      %v472 = vlaneseq
      %v473 = vshrl.u32 %v472, 7
      %v474 = vsub.s32 1, %v473
      %v475 = vrot.slane %v466, %v474
      %v476 = vlaneseq
      %v477 = vshrl.u32 %v476, 7
      %v478 = vsub.s32 2, %v477
      %v479 = vrot.slane %v466, %v478
      %v483 = vmul.f32 %v399, %v471
      %v484 = vmul.f32 %v401, %v475
      %v485 = vmul.f32 %v452, %v479
      %v486 = vadd.f32 %v483, %v484
      %v487 = vadd.f32 %v486, %v485
      %488 = vadd.xlane.f32.xlu0 %v487
      %v489 = vpop.xlane.xlu0 %488
      %v490 = vmul.f32 %v489, 0.00390625
      %v491 = vsub.f32 %v399, %v490
      %v492 = vsub.f32 %v401, %v490
      %v493 = vsub.f32 %v452, %v490
      %v494 = vmul.f32 %v491, %v491
      %v495 = vmul.f32 %v492, %v492
      %v496 = vmul.f32 %v493, %v493
      %v497 = vmul.f32 %v494, %v471
      %v498 = vmul.f32 %v495, %v475
      %v499 = vmul.f32 %v496, %v479
      %v500 = vadd.f32 %v497, %v498
      %v501 = vadd.f32 %v500, %v499
      %502 = vadd.xlane.f32.xlu0 %v501
      %v503 = vpop.xlane.xlu0 %502
      %v504 = vmul.f32 %v503, 0.00390625
      %v505 = vadd.f32 %v504, 1e-05
      %v506 = vrsqrt.pop %v505
      %v507 = vmul.f32 %v491, %v506
      %v508 = vmul.f32 %v492, %v506
      %v509 = vmul.f32 %v493, %v506
      %v510 = vld [vmem:[%s4] sm:$0xff]
      %512 = vset.pattern.permute.xlu0 0
      %513 = vperm.xlu0 %512, %v510
      %v514 = vpop.permute.xlu0 %513
      %v516 = vmul.f32 %v507, %v514
      %v517 = vmul.f32 %v508, %v514
      %v518 = vmul.f32 %v509, %v514
      %v519 = vld [vmem:[%s5] sm:$0xff]
      %521 = vset.pattern.permute.xlu0 0
      %522 = vperm.xlu0 %521, %v519
      %v523 = vpop.permute.xlu0 %522
      %v525 = vadd.f32 %v516, %v523
      %v526 = vadd.f32 %v517, %v523
      %v527 = vadd.f32 %v518, %v523
      %vm528 = vcmp.ge.f32.partialorder %v525, 0.0
      %vm529 = vcmp.ge.f32.partialorder %v526, 0.0
      %vm530 = vcmp.ge.f32.partialorder %v527, 0.0
      %vm531 = vcmp.ge.f32.partialorder %v403, 0.0
      %vm532 = vcmp.ge.f32.partialorder %v405, 0.0
      %vm533 = vcmp.ge.f32.partialorder %v455, 0.0
      %v534 = vmul.f32 %v525, 0.1
      %v535 = vmul.f32 %v526, 0.1
      %v536 = vmul.f32 %v527, 0.1
      %v537 = vmul.f32 %v403, 0.1
      %v538 = vmul.f32 %v405, 0.1
      %v539 = vmul.f32 %v455, 0.1
      %v540 = vsel %vm528, %v525, %v534
      %v541 = vsel %vm529, %v526, %v535
      %v542 = vsel %vm530, %v527, %v536
      %v543 = vsel %vm531, %v403, %v537
      %v544 = vsel %vm532, %v405, %v538
      %v545 = vsel %vm533, %v455, %v539
      %v546 = vmul.f32 %v540, %v471
      %v547 = vmul.f32 %v541, %v475
      %v548 = vmul.f32 %v542, %v479
      %v549 = vmul.f32 %v543, %v471
      %v550 = vmul.f32 %v544, %v475
      %v551 = vmul.f32 %v545, %v479
      %v552 = vpack.c.bf16 %v549, %v546
      %v553 = vpack.c.bf16 %v550, %v547
      %v554 = vpack.c.bf16 %v551, %v548
      %558 = vrot.lane.b32.xlu0 %v552, 19
      %v559 = vpop.permute.xlu0 %558
      %560 = vrot.lane.b32.xlu0 %v553, 19
      %v561 = vpop.permute.xlu0 %560
      %562 = vrot.lane.b32.xlu0 %v554, 19
      %v563 = vpop.permute.xlu0 %562
      %vm564 = vcmask 154624
      %v565 = vsel %vm564, %v559, %v561
      %v566 = vsel %vm564, %v561, %v563
      %vm571 = vcmask 1047704
      %572 = vst.msk [vmem:[#allocation2 + $0x8] sm:$0xff] %vm571, %v559
      %573 = vst [vmem:[#allocation2 + $0x10] sm:$0xff] %v565
      %574 = vst [vmem:[#allocation2 + $0x18] sm:$0xff] %v566
      %vm575 = vcmask 154624
      %576 = vst.msk [vmem:[#allocation2 + $0x20] sm:$0xff] %vm575, %v563
      %577 = vrot.lane.b32.xlu0 %v552, 18
      %v578 = vpop.permute.xlu0 %577
      %579 = vrot.lane.b32.xlu0 %v553, 18
      %v580 = vpop.permute.xlu0 %579
      %581 = vrot.lane.b32.xlu0 %v554, 18
      %v582 = vpop.permute.xlu0 %581
      %vm583 = vcmask 146432
      %v584 = vsel %vm583, %v578, %v580
      %v585 = vsel %vm583, %v580, %v582
      %vm590 = vcmask 1047696
      %591 = vst.msk [vmem:[#allocation2 + $0x30] sm:$0xff] %vm590, %v578
      %592 = vst [vmem:[#allocation2 + $0x38] sm:$0xff] %v584
      %593 = vst [vmem:[#allocation2 + $0x40] sm:$0xff] %v585
      %vm594 = vcmask 146432
      %595 = vst.msk [vmem:[#allocation2 + $0x48] sm:$0xff] %vm594, %v582
      %596 = vrot.lane.b32.xlu0 %v552, 17
      %v597 = vpop.permute.xlu0 %596
      %598 = vrot.lane.b32.xlu0 %v553, 17
      %v599 = vpop.permute.xlu0 %598
      %600 = vrot.lane.b32.xlu0 %v554, 17
      %v601 = vpop.permute.xlu0 %600
      %vm602 = vcmask 138240
      %v603 = vsel %vm602, %v597, %v599
      %v604 = vsel %vm602, %v599, %v601
      %vm609 = vcmask 1047688
      %610 = vst.msk [vmem:[#allocation2 + $0x58] sm:$0xff] %vm609, %v597
      %611 = vst [vmem:[#allocation2 + $0x60] sm:$0xff] %v603
      %612 = vst [vmem:[#allocation2 + $0x68] sm:$0xff] %v604
      %vm613 = vcmask 138240
      %614 = vst.msk [vmem:[#allocation2 + $0x70] sm:$0xff] %vm613, %v601
      %615 = vrot.lane.b32.xlu0 %v552, 1
      %v616 = vpop.permute.xlu0 %615
      %617 = vrot.lane.b32.xlu0 %v553, 1
      %v618 = vpop.permute.xlu0 %617
      %619 = vrot.lane.b32.xlu0 %v554, 1
      %v620 = vpop.permute.xlu0 %619
      %vm621 = vcmask 7168
      %v622 = vsel %vm621, %v616, %v618
      %v623 = vsel %vm621, %v618, %v620
      %vm628 = vcmask 1047560
      %629 = vst.msk [vmem:[#allocation2 + $0x80] sm:$0xff] %vm628, %v616
      %630 = vst [vmem:[#allocation2 + $0x88] sm:$0xff] %v622
      %631 = vst [vmem:[#allocation2 + $0x90] sm:$0xff] %v623
      %vm632 = vcmask 7168
      %633 = vst.msk [vmem:[#allocation2 + $0x98] sm:$0xff] %vm632, %v620
      %634 = vst [vmem:[#allocation2 + $0xa8] sm:$0xff] %v552
      %635 = vst [vmem:[#allocation2 + $0xb0] sm:$0xff] %v553
      %636 = vst [vmem:[#allocation2 + $0xb8] sm:$0xff] %v554
      %637 = vrot.lane.b32.xlu0 %v552, 127
      %v638 = vpop.permute.xlu0 %637
      %639 = vrot.lane.b32.xlu0 %v553, 127
      %v640 = vpop.permute.xlu0 %639
      %641 = vrot.lane.b32.xlu0 %v554, 127
      %v642 = vpop.permute.xlu0 %641
      %vm643 = vcmask 1039360
      %v644 = vsel %vm643, %v638, %v640
      %v645 = vsel %vm643, %v640, %v642
      %vm650 = vcmask 1048568
      %651 = vst.msk [vmem:[#allocation2 + $0xc8] sm:$0xff] %vm650, %v638
      %652 = vst [vmem:[#allocation2 + $0xd0] sm:$0xff] %v644
      %653 = vst [vmem:[#allocation2 + $0xd8] sm:$0xff] %v645
      %vm654 = vcmask 1039360
      %655 = vst.msk [vmem:[#allocation2 + $0xe0] sm:$0xff] %vm654, %v642
      %656 = vrot.lane.b32.xlu0 %v552, 111
      %v657 = vpop.permute.xlu0 %656
      %658 = vrot.lane.b32.xlu0 %v553, 111
      %v659 = vpop.permute.xlu0 %658
      %660 = vrot.lane.b32.xlu0 %v554, 111
      %v661 = vpop.permute.xlu0 %660
      %vm662 = vcmask 908288
      %v663 = vsel %vm662, %v657, %v659
      %v664 = vsel %vm662, %v659, %v661
      %vm669 = vcmask 1048440
      %670 = vst.msk [vmem:[#allocation2 + $0xf0] sm:$0xff] %vm669, %v657
      %671 = vst [vmem:[#allocation2 + $0xf8] sm:$0xff] %v663
      %672 = vst [vmem:[#allocation2 + $0x100] sm:$0xff] %v664
      %vm673 = vcmask 908288
      %674 = vst.msk [vmem:[#allocation2 + $0x108] sm:$0xff] %vm673, %v661
      %675 = vrot.lane.b32.xlu0 %v552, 110
      %v676 = vpop.permute.xlu0 %675
      %677 = vrot.lane.b32.xlu0 %v553, 110
      %v678 = vpop.permute.xlu0 %677
      %679 = vrot.lane.b32.xlu0 %v554, 110
      %v680 = vpop.permute.xlu0 %679
      %vm681 = vcmask 900096
      %v682 = vsel %vm681, %v676, %v678
      %v683 = vsel %vm681, %v678, %v680
      %vm688 = vcmask 1048432
      %689 = vst.msk [vmem:[#allocation2 + $0x118] sm:$0xff] %vm688, %v676
      %690 = vst [vmem:[#allocation2 + $0x120] sm:$0xff] %v682
      %691 = vst [vmem:[#allocation2 + $0x128] sm:$0xff] %v683
      %vm692 = vcmask 900096
      %693 = vst.msk [vmem:[#allocation2 + $0x130] sm:$0xff] %vm692, %v680
      %694 = vrot.lane.b32.xlu0 %v552, 109
      %v695 = vpop.permute.xlu0 %694
      %696 = vrot.lane.b32.xlu0 %v553, 109
      %v697 = vpop.permute.xlu0 %696
      %698 = vrot.lane.b32.xlu0 %v554, 109
      %v699 = vpop.permute.xlu0 %698
      %vm700 = vcmask 891904
      %v701 = vsel %vm700, %v695, %v697
      %v702 = vsel %vm700, %v697, %v699
      %vm707 = vcmask 1048424
      %708 = vst.msk [vmem:[#allocation2 + $0x140] sm:$0xff] %vm707, %v695
      %709 = vst [vmem:[#allocation2 + $0x148] sm:$0xff] %v701
      %710 = vst [vmem:[#allocation2 + $0x150] sm:$0xff] %v702
      %vm711 = vcmask 891904
      %712 = vst.msk [vmem:[#allocation2 + $0x158] sm:$0xff] %vm711, %v699
      %v713 = vld [vmem:[%s2] sm:$0xff]
      %v714 = vld [vmem:[%s2 + $0x8] sm:$0xff]
      %v715 = vld [vmem:[#allocation2 + $0x8] sm:$0xff]
      %v716 = vld [vmem:[#allocation2 + $0x10] sm:$0xff]
      %v717 = vld [vmem:[#allocation2 + $0x18] sm:$0xff]
      %v718 = vld [vmem:[#allocation2 + $0x30] sm:$0xff]
      %v719 = vld [vmem:[#allocation2 + $0x38] sm:$0xff]
      %v720 = vld [vmem:[#allocation2 + $0x40] sm:$0xff]
      %v721 = vld [vmem:[#allocation2 + $0x58] sm:$0xff]
      %v722 = vld [vmem:[#allocation2 + $0x60] sm:$0xff]
      %v723 = vld [vmem:[#allocation2 + $0x68] sm:$0xff]
      %v724 = vld [vmem:[#allocation2 + $0x80] sm:$0xff]
      %v725 = vld [vmem:[#allocation2 + $0x88] sm:$0xff]
      %v726 = vld [vmem:[#allocation2 + $0x90] sm:$0xff]
      %v727 = vld [vmem:[#allocation2 + $0xa8] sm:$0xff]
      %v728 = vld [vmem:[#allocation2 + $0xb0] sm:$0xff]
      %v729 = vld [vmem:[#allocation2 + $0xb8] sm:$0xff]
      %v730 = vld [vmem:[#allocation2 + $0xd0] sm:$0xff]
      %v731 = vld [vmem:[#allocation2 + $0xd8] sm:$0xff]
      %v732 = vld [vmem:[#allocation2 + $0xe0] sm:$0xff]
      %v733 = vld [vmem:[#allocation2 + $0xf8] sm:$0xff]
      %v734 = vld [vmem:[#allocation2 + $0x100] sm:$0xff]
      %v735 = vld [vmem:[#allocation2 + $0x108] sm:$0xff]
      %v736 = vld [vmem:[#allocation2 + $0x120] sm:$0xff]
      %v737 = vld [vmem:[#allocation2 + $0x128] sm:$0xff]
      %v738 = vld [vmem:[#allocation2 + $0x130] sm:$0xff]
      %v739 = vld [vmem:[#allocation2 + $0x148] sm:$0xff]
      %v740 = vld [vmem:[#allocation2 + $0x150] sm:$0xff]
      %v741 = vld [vmem:[#allocation2 + $0x158] sm:$0xff]
      %v742 = vld [vmem:[%s3] sm:$0xff]
      %v743 = vld [vmem:[%s3 + $0x8] sm:$0xff]
      %745 = vset.pattern.permute.xlu0 0
      %746 = vperm.xlu0 %745, %v742
      %v747 = vpop.permute.xlu0 %746
      %750 = vset.pattern.permute.xlu0 0
      %751 = vperm.xlu0 %750, %v743
      %v752 = vpop.permute.xlu0 %751
      %v756 = vunpack.c.l.b16 %v713
      %v757 = vunpack.c.h.b16 %v713
      %v758 = vunpack.c.l.b16 %v714
      %v759 = vunpack.c.h.b16 %v714
      %v760 = vpack.c.b16 %v758, %v756
      %v761 = vpack.c.b16 %v759, %v757
      %vm763 = vcmask 130048
      %v765 = vsel %vm763, %v761, 0
      %767 = vmatprep.subr.bf16.mxu0 %v716
      %768 = vmatpush1.bf16.msra.mxu0 %v715
      %769 = vmatprep.subr.bf16.mxu0 %v719
      %770 = vmatpush1.bf16.msra.mxu0 %v718
      %771 = vmatprep.subr.bf16.mxu0 %v722
      %772 = vmatpush1.bf16.msra.mxu0 %v721
      %773 = vmatprep.subr.bf16.mxu0 %v725
      %774 = vmatpush1.bf16.msra.mxu0 %v724
      %775 = vmatprep.subr.bf16.mxu0 %v728
      %776 = vmatpush1.bf16.msra.mxu0 %v727
      %777 = vmatprep.subr.bf16.mxu0 %v731
      %778 = vmatpush1.bf16.msra.mxu0 %v730
      %779 = vmatprep.subr.bf16.mxu0 %v734
      %780 = vmatpush1.bf16.msra.mxu0 %v733
      %781 = vmatprep.subr.bf16.mxu0 %v737
      %782 = vmatpush1.bf16.msra.mxu0 %v736
      %783 = vmatprep.subr.bf16.mxu0 %v740
      %784 = vmatpush1.bf16.msra.mxu0 %v739
      %785 = vmatprep.subr.bf16.mxu0 0
      %786 = vmatpush1.bf16.msra.mxu0 0
      %787 = vmatprep.subr.bf16.mxu0 0
      %788 = vmatpush1.bf16.msra.mxu0 0
      %789 = vmatprep.subr.bf16.mxu0 0
      %790 = vmatpush1.bf16.msra.mxu0 0
      %791 = vmatprep.subr.bf16.mxu0 0
      %792 = vmatpush1.bf16.msra.mxu0 0
      %793 = vmatprep.subr.bf16.mxu0 0
      %794 = vmatpush1.bf16.msra.mxu0 0
      %795 = vmatprep.subr.bf16.mxu0 0
      %796 = vmatpush1.bf16.msra.mxu0 0
      %797 = vmatprep.subr.bf16.mxu0 0
      %798 = vmatpush1.bf16.msra.mxu0 0
      %799 = vmatprep.mubr.bf16.mxu0 %v765
      %800 = vmatmul.mubr.bf16.gmra.mrb[0].mxu0 %v760
      %v801 = vpop.f32.mrb[0].mxu0
      %v802 = vadd.f32 %v747, %v801
      %v803 = vpop.f32.mrb[0].mxu0
      %v804 = vadd.f32 %v747, %v803
      %v805 = vpop.f32.mrb[0].mxu0
      %v806 = vadd.f32 %v752, %v805
      %v807 = vpop.f32.mrb[0].mxu0
      %v808 = vadd.f32 %v752, %v807
      %809 = vdwg.mxu0
      %810 = vmatprep.subr.bf16.mxu0 0
      %811 = vmatpush1.bf16.msra.mxu0 %v717
      %812 = vmatprep.subr.bf16.mxu0 0
      %813 = vmatpush1.bf16.msra.mxu0 %v720
      %814 = vmatprep.subr.bf16.mxu0 0
      %815 = vmatpush1.bf16.msra.mxu0 %v723
      %816 = vmatprep.subr.bf16.mxu0 0
      %817 = vmatpush1.bf16.msra.mxu0 %v726
      %818 = vmatprep.subr.bf16.mxu0 0
      %819 = vmatpush1.bf16.msra.mxu0 %v729
      %820 = vmatprep.subr.bf16.mxu0 0
      %821 = vmatpush1.bf16.msra.mxu0 %v732
      %822 = vmatprep.subr.bf16.mxu0 0
      %823 = vmatpush1.bf16.msra.mxu0 %v735
      %824 = vmatprep.subr.bf16.mxu0 0
      %825 = vmatpush1.bf16.msra.mxu0 %v738
      %826 = vmatprep.subr.bf16.mxu0 0
      %827 = vmatpush1.bf16.msra.mxu0 %v741
      %828 = vmatprep.subr.bf16.mxu0 0
      %829 = vmatpush1.bf16.msra.mxu0 0
      %830 = vmatprep.subr.bf16.mxu0 0
      %831 = vmatpush1.bf16.msra.mxu0 0
      %832 = vmatprep.subr.bf16.mxu0 0
      %833 = vmatpush1.bf16.msra.mxu0 0
      %834 = vmatprep.subr.bf16.mxu0 0
      %835 = vmatpush1.bf16.msra.mxu0 0
      %836 = vmatprep.subr.bf16.mxu0 0
      %837 = vmatpush1.bf16.msra.mxu0 0
      %838 = vmatprep.subr.bf16.mxu0 0
      %839 = vmatpush1.bf16.msra.mxu0 0
      %840 = vmatprep.subr.bf16.mxu0 0
      %841 = vmatpush1.bf16.msra.mxu0 0
      %842 = vmatprep.mubr.bf16.mxu0 %v765
      %843 = vmatmul.mubr.bf16.gmra.mrb[0].mxu0 %v760
      %v844 = vpop.f32.mrb[0].mxu0
      %v845 = vadd.f32 %v747, %v844
      %v846 = vpop.f32.mrb[0].mxu0
      %v847 = vpop.f32.mrb[0].mxu0
      %v848 = vadd.f32 %v752, %v847
      %v849 = vpop.f32.mrb[0].mxu0
      %850 = vdwg.mxu0
      %vm851 = vcmp.ge.f32.partialorder %v802, 0.0
      %vm852 = vcmp.ge.f32.partialorder %v804, 0.0
      %vm853 = vcmp.ge.f32.partialorder %v845, 0.0
      %vm854 = vcmp.ge.f32.partialorder %v806, 0.0
      %vm855 = vcmp.ge.f32.partialorder %v808, 0.0
      %vm856 = vcmp.ge.f32.partialorder %v848, 0.0
      %v857 = vmul.f32 %v802, 0.1
      %v858 = vmul.f32 %v804, 0.1
      %v859 = vmul.f32 %v845, 0.1
      %v860 = vmul.f32 %v806, 0.1
      %v861 = vmul.f32 %v808, 0.1
      %v862 = vmul.f32 %v848, 0.1
      %v863 = vsel %vm851, %v802, %v857
      %v864 = vsel %vm852, %v804, %v858
      %v865 = vsel %vm853, %v845, %v859
      %v866 = vsel %vm854, %v806, %v860
      %v867 = vsel %vm855, %v808, %v861
      %v868 = vsel %vm856, %v848, %v862
      %v869 = vadd.f32 %v863, %v409
      %v870 = vadd.f32 %v864, %v411
      %v871 = vadd.f32 %v865, %v460
      %v872 = vadd.f32 %v866, %v413
      %v873 = vadd.f32 %v867, %v415
      %v874 = vadd.f32 %v868, %v463
      %875 = vst [vmem:[%s278] sm:$0xff] %v869
      %876 = vst [vmem:[%s278 + $0x8] sm:$0xff] %v870
      %877 = vst [vmem:[%s278 + $0x10] sm:$0xff] %v871
      %878 = vst [vmem:[%s278 + $0x18] sm:$0xff] %v872
      %879 = vst [vmem:[%s278 + $0x20] sm:$0xff] %v873
      %880 = vst [vmem:[%s278 + $0x28] sm:$0xff] %v874
      %p881 = scmp.lt.s32.totalorder %s18, 1
      %s882 = scalar_select %p881, %s18, 1
      %s883 = smul.addr %s882, 6
      %s884 = smul.addr %s883, 8
      %s885 = scalar_lea.vmem %s7, %s884
      // Predicated region
      $region49: #{unet_conv_block.1} parent=47 // pred_check
        %p886 = pneg %p188
      $region50: #{unet_conv_block.1} parent=47 // pred_check_branch
        %888 = sbr.rel (%p886) target = $region52
      $region51: #{unet_conv_block.1} parent=47 // pred_region
        _
      $region52: #{unet_conv_block.1} parent=47 // pred_fallthru
        _
    $region48: #{unet_conv_block.1} parent=5 // pred_fallthru
      _
    %p889 = scmp.le.s32.totalorder 2, %s13
    // Predicated region
    $region53: #{unet_conv_block.1} parent=5 // pred_check
      %p890 = pneg %p889
    $region54: #{unet_conv_block.1} parent=5 // pred_check_branch
      %892 = sbr.rel (%p890) target = $region56
    $region55: #{unet_conv_block.1} parent=5 // pred_region
      %s893 = ssub.s32 %s13, 2
      // Predicated region
      $region57: #{unet_conv_block.1} parent=55 // pred_check
        %p894 = pneg %p194
      $region58: #{unet_conv_block.1} parent=55 // pred_check_branch
        %896 = sbr.rel (%p894) target = $region60
      $region59: #{unet_conv_block.1} parent=55 // pred_region
        %p897 = scmp.lt.s32.totalorder %s19, 1
        %s898 = scalar_select %p897, %s19, 1
        %s899 = smul.addr %s898, 6
        %s900 = smul.addr %s899, 8
        %s901 = scalar_lea.vmem %s7, %s900
      $region60: #{unet_conv_block.1} parent=55 // pred_fallthru
        _
    $region56: #{unet_conv_block.1} parent=5 // pred_fallthru
      _
  $region6: #{unet_conv_block.1} parent=0 // loop_footer
    %s17 = sadd.s32 1, %s13
  $region7: #{unet_conv_block.1} parent=0 // loop_footer_branch
    %12 = sbr.rel target = $region3
  $region8: #{unet_conv_block.1} parent=0 // loop_exit
    _

</llo_original>
